<compile_context>
chip_gen: v6e
topology: v6e:2x2x1
jax: 0.10.0
libtpu: 0.0.40
codegen_flags: <defaults>
</compile_context>

<pallas_src>
import functools

import jax
import jax.numpy as jnp
import numpy as np
from jax import lax
from jax.experimental import pallas as pl
from jax.experimental.pallas import tpu as pltpu

EPS = 1e-5  # nn.BatchNorm2d default eps


def _round_up(x, m):
    return (x + m - 1) // m * m


def _tpu_vmem_bytes():
    """Physical VMEM of the attached TPU; conservative 64 MiB if unknown."""
    try:
        info = pltpu.get_tpu_info()
        cap = getattr(info, "vmem_capacity_bytes", None)
        if cap:
            return int(cap)
    except Exception:
        pass
    return 64 * 1024 * 1024


# ---------------------------------------------------------------------------
# Shared per-tile branch computation on a [9*C, tile_s] tap block.
# ---------------------------------------------------------------------------
def _branches(patch, w):
    c = patch.shape[0] // 9
    # Conv branch: zero the -inf padding taps, then one MXU matmul.
    # (NOTE: this also zeroes NaNs, a negligible deviation from PyTorch.)
    conv_in = jnp.where(patch > -jnp.inf, patch, jnp.zeros_like(patch))
    main = jnp.dot(w, conv_in, preferred_element_type=jnp.float32)   # [Cm, tile_s]
    # Pool branch: 3x3/stride-2 max-pool = max over the 9 taps; the -inf
    # padding reproduces PyTorch MaxPool2d(padding=1) exactly.
    ext = patch[0:c, :]
    for k in range(1, 9):
        ext = jnp.maximum(ext, patch[k * c:(k + 1) * c, :])
    return main, ext.astype(jnp.float32)


# ---------------------------------------------------------------------------
# Pass 1: per-(batch, spatial-tile) partial per-channel sum / sum-of-squares
# ---------------------------------------------------------------------------
def _stats_kernel(patch_ref, w_ref, stats_ref):
    # patch_ref: [9*C, tile_s], w_ref: [Cm, 9*C], stats_ref: [Cout, 2] partials.
    main, ext = _branches(patch_ref[...], w_ref[...])
    # Per-channel (sublane) sums over the spatial (lane) axis BEFORE any concat.
    s_main = jnp.concatenate([jnp.sum(main, axis=1, keepdims=True),
                              jnp.sum(main * main, axis=1, keepdims=True)], axis=1)
    s_ext = jnp.concatenate([jnp.sum(ext, axis=1, keepdims=True),
                             jnp.sum(ext * ext, axis=1, keepdims=True)], axis=1)
    stats_ref[...] = jnp.concatenate([s_main, s_ext], axis=0)        # [Cout, 2]


# ---------------------------------------------------------------------------
# Pass 2: recompute branches, folded-BN affine + ReLU, lane-dense NCHW output
# ---------------------------------------------------------------------------
def _apply_kernel(patch_ref, w_ref, scale_ref, shift_ref, out_ref):
    # w_ref already carries the folded BN scale for the Cm conv channels.
    cm = w_ref.shape[0]
    main, ext = _branches(patch_ref[...], w_ref[...])
    main = main + shift_ref[0:cm, :]
    ext = ext * scale_ref[cm:, :] + shift_ref[cm:, :]
    out_ref[...] = jnp.maximum(jnp.concatenate([main, ext], axis=0), 0.0)


# ---------------------------------------------------------------------------
# Wrapper
# ---------------------------------------------------------------------------
def initial_block(x, w, gamma, beta, *, tile_s=None, stream_dtype=jnp.float32):
    """ENet InitialBlock forward.

    x: [N, C, H, W] f32 (NCHW).  w: [C_out-3, C, 3, 3] (OIHW).  gamma/beta: [C_out].
    Returns [N, C_out, Ho, Wo] f32 with Ho = ceil(H/2), Wo = ceil(W/2).
    """
    N, C, H, W = x.shape
    Cm = w.shape[0]                   # main-branch channels (out_channels - 3)
    Cout = Cm + C
    assert gamma.shape == (Cout,) and beta.shape == (Cout,)
    Ho = (H - 1) // 2 + 1
    Wo = (W - 1) // 2 + 1
    S = Ho * Wo
    P = N * S                         # true BN divisor (padded positions excluded)
    K = 9 * C

    # --- generation-aware tiling: big spatial tiles, VMEM-capped -------------
    vmem_cap = _tpu_vmem_bytes()
    if tile_s is None:
        tile_s = 16384 if vmem_cap >= 128 * 1024 * 1024 else 8192
    tile_s = _round_up(min(tile_s, _round_up(S, 128)), 128)
    S_pad = _round_up(S, tile_s)
    grid = (N, S_pad // tile_s)
    vmem_limit = int(min(vmem_cap * 3 // 4, 96 * 1024 * 1024))

    # --- glue: ONE shared tap tensor [N, 9*C, S], taps on sublanes -----------
    # -inf spatial-border padding feeds the max-pool directly; the conv branch
    # zeroes it in-register.  Extra S_pad-S positions are zero, contributing 0
    # to both branches and therefore 0 to the BN sums/sumsq (mean/var use P).
    xp = jnp.pad(x, ((0, 0), (0, 0), (1, 1), (1, 1)), constant_values=-jnp.inf)
    taps = [xp[:, :, kh:kh + 2 * Ho:2, kw:kw + 2 * Wo:2]
            for kh in range(3) for kw in range(3)]            # 9 x [N, C, Ho, Wo]
    patches = jnp.stack(taps, axis=1).reshape(N, K, S)        # row index = k*C + c
    patches = patches.astype(stream_dtype)
    if S_pad != S:
        patches = jnp.pad(patches, ((0, 0), (0, 0), (0, S_pad - S)))

    # Conv weight as [Cm, (kh,kw,c)] matching the tap-major patch rows.
    w_mat = w.transpose(0, 2, 3, 1).reshape(Cm, K).astype(jnp.float32)

    in_bytes = jnp.dtype(stream_dtype).itemsize
    flops = 2 * N * S_pad * K * Cm
    compiler_common = dict(vmem_limit_bytes=vmem_limit)

    # ---- pass 1: per-tile partial stats (fully parallel, no accumulator) ----
    partials = pl.pallas_call(
        _stats_kernel,
        out_shape=jax.ShapeDtypeStruct((N, grid[1], Cout, 2), jnp.float32),
        grid_spec=pltpu.PrefetchScalarGridSpec(
            num_scalar_prefetch=0, grid=grid,
            in_specs=[pl.BlockSpec((None, K, tile_s), lambda n, s: (n, 0, s)),
                      pl.BlockSpec((Cm, K), lambda n, s: (0, 0))],
            out_specs=pl.BlockSpec((None, None, Cout, 2),
                                   lambda n, s: (n, s, 0, 0))),
        compiler_params=pltpu.CompilerParams(
            dimension_semantics=("parallel", "parallel"), **compiler_common),
        cost_estimate=pl.CostEstimate(
            flops=flops, transcendentals=0,
            bytes_accessed=N * S_pad * K * in_bytes),
    )(patches, w_mat.astype(stream_dtype))

    # Global BN statistics (training mode, biased variance); wrapper-side tree
    # reduction over the per-tile partials keeps f32 accumulation chains short.
    stats = jnp.sum(partials, axis=(0, 1))                     # [Cout, 2]
    mean = stats[:, 0] / P
    var = jnp.maximum(stats[:, 1] / P - mean * mean, 0.0)
    scale = gamma * lax.rsqrt(var + EPS)
    shift = beta - mean * scale

    # Fold the BN scale of the conv channels into the pass-2 weights.
    w_fold = (w_mat * scale[:Cm, None]).astype(stream_dtype)
    scale_col = scale.reshape(Cout, 1).astype(jnp.float32)
    shift_col = shift.reshape(Cout, 1).astype(jnp.float32)

    # ---- pass 2: affine + ReLU, lane-dense stores straight into NCHW --------
    out_flat = pl.pallas_call(
        _apply_kernel,
        out_shape=jax.ShapeDtypeStruct((N, Cout, S_pad), jnp.float32),
        grid_spec=pltpu.PrefetchScalarGridSpec(
            num_scalar_prefetch=0, grid=grid,
            in_specs=[pl.BlockSpec((None, K, tile_s), lambda n, s: (n, 0, s)),
                      pl.BlockSpec((Cm, K), lambda n, s: (0, 0)),
                      pl.BlockSpec((Cout, 1), lambda n, s: (0, 0)),
                      pl.BlockSpec((Cout, 1), lambda n, s: (0, 0))],
            out_specs=pl.BlockSpec((None, Cout, tile_s), lambda n, s: (n, 0, s))),
        compiler_params=pltpu.CompilerParams(
            dimension_semantics=("parallel", "parallel"), **compiler_common),
        cost_estimate=pl.CostEstimate(
            flops=flops, transcendentals=0,
            bytes_accessed=N * S_pad * (K * in_bytes + Cout * 4)),
    )(patches, w_fold, scale_col, shift_col)

    if S_pad != S:
        out_flat = out_flat[:, :, :S]
    return out_flat.reshape(N, Cout, Ho, Wo)      # already NCHW — no transpose


# ---------------------------------------------------------------------------
# Pure-JAX reference (validation)
# ---------------------------------------------------------------------------
def reference(x, w, gamma, beta):
    main = lax.conv_general_dilated(x, w, (2, 2), ((1, 1), (1, 1)),
                                    dimension_numbers=('NCHW', 'OIHW', 'NCHW'))
    ext = lax.reduce_window(x, -jnp.inf, lax.max, (1, 1, 3, 3), (1, 1, 2, 2),
                            ((0, 0), (0, 0), (1, 1), (1, 1)))
    out = jnp.concatenate([main, ext], axis=1)
    mean = out.mean(axis=(0, 2, 3), keepdims=True)
    var = ((out - mean) ** 2).mean(axis=(0, 2, 3), keepdims=True)
    y = (out - mean) * lax.rsqrt(var + EPS) \
        * gamma.reshape(1, -1, 1, 1) + beta.reshape(1, -1, 1, 1)
    return jnp.maximum(y, 0.0)


if __name__ == "__main__":
    key = jax.random.PRNGKey(0)
    kx, kw, kg, kb = jax.random.split(key, 4)

    # ENet InitialBlock: in_channels=3, out_channels=16 (13 conv + 3 pool maps).
    N, C, H, W = 2, 3, 32, 32
    out_channels = 16

    x = jax.random.normal(kx, (N, C, H, W), jnp.float32)
    w = jax.random.normal(kw, (out_channels - 3, C, 3, 3), jnp.float32) * 0.1
    gamma = 1.0 + 0.1 * jax.random.normal(kg, (out_channels,), jnp.float32)
    beta = 0.1 * jax.random.normal(kb, (out_channels,), jnp.float32)

    ref = reference(x, w, gamma, beta)
    ib = jax.jit(initial_block, static_argnames=("tile_s", "stream_dtype"))

    # 1) Production (auto) config: tile_s auto-clamps to the toy spatial size.
    out = ib(x, w, gamma, beta)
    jax.block_until_ready(out)
    np.testing.assert_allclose(np.asarray(out), np.asarray(ref), rtol=2e-4, atol=2e-4)

    # 2) Force a small spatial tile so the multi-step pipeline / per-tile BN
    #    partial-stats reduction is exercised at these toy shapes (production
    #    shapes use the auto tile_s of 8192/16384).
    out_tiled = ib(x, w, gamma, beta, tile_s=128)
    jax.block_until_ready(out_tiled)
    np.testing.assert_allclose(np.asarray(out_tiled), np.asarray(ref),
                               rtol=2e-4, atol=2e-4)

    # 3) bf16 streaming path (halves the dominant patch-stream HBM read; BN
    #    renormalizes, so a looser tolerance suffices).
    out_bf16 = ib(x, w, gamma, beta, stream_dtype=jnp.bfloat16)
    jax.block_until_ready(out_bf16)
    np.testing.assert_allclose(np.asarray(out_bf16), np.asarray(ref),
                               rtol=5e-2, atol=5e-2)

    print("KERNEL_OK")
</pallas_src>

<mosaic_0001>
module attributes {stable_mosaic.version = 11 : i64} {
  func.func @_stats_kernel(%arg0: i32, %arg1: i32, %arg2: memref<1x27x256xf32, #tpu.memory_space<vmem>>, %arg3: memref<13x27xf32, #tpu.memory_space<vmem>>, %arg4: memref<1x1x16x2xf32, #tpu.memory_space<vmem>>) attributes {dimension_semantics = [#tpu.dimension_semantics<parallel>, #tpu.dimension_semantics<parallel>], iteration_bounds = array<i64: 2, 1>, scalar_prefetch = 0 : i64, scratch_operands = 0 : i64, tpu.core_type = #tpu.core_type<tc>, window_params = [{transform_indices = @transform_0, window_bounds = array<i64: 1, 27, 256>}, {pipeline_mode = #tpu.pipeline_mode<synchronous>, transform_indices = @transform_1, window_bounds = array<i64: 13, 27>}, {transform_indices = @transform_2, window_bounds = array<i64: 1, 1, 16, 2>}]} {
    %c0 = arith.constant 0 : index
    %c0_0 = arith.constant 0 : index
    %c0_1 = arith.constant 0 : index
    %0 = vector.load %arg2[%c0, %c0_0, %c0_1] : memref<1x27x256xf32, #tpu.memory_space<vmem>>, vector<1x27x256xf32>
    %1 = vector.shape_cast %0 : vector<1x27x256xf32> to vector<27x256xf32>
    %c0_2 = arith.constant 0 : index
    %c0_3 = arith.constant 0 : index
    %2 = vector.load %arg3[%c0_2, %c0_3] : memref<13x27xf32, #tpu.memory_space<vmem>>, vector<13x27xf32>
    %cst = arith.constant 0xFF800000 : f32
    %3 = vector.broadcast %cst : f32 to vector<27x256xf32>
    %4 = arith.cmpf ogt, %1, %3 : vector<27x256xf32>
    %cst_4 = arith.constant 0.000000e+00 : f32
    %5 = vector.broadcast %cst_4 : f32 to vector<27x256xf32>
    %6 = arith.select %4, %1, %5 : vector<27x256xi1>, vector<27x256xf32>
    %cst_5 = arith.constant dense<0.000000e+00> : vector<13x256xf32>
    %7 = tpu.matmul %2, %6, %cst_5 {dimension_numbers = #tpu.dot_dimension_numbers<[1], [0], [0], [1], [0, 0, 1, 1], [], []>} : vector<13x27xf32>, vector<27x256xf32>, vector<13x256xf32> -> vector<13x256xf32>
    %8 = vector.extract_strided_slice %1 {offsets = [0, 0], sizes = [3, 256], strides = [1, 1]} : vector<27x256xf32> to vector<3x256xf32>
    %9 = vector.extract_strided_slice %1 {offsets = [3, 0], sizes = [3, 256], strides = [1, 1]} : vector<27x256xf32> to vector<3x256xf32>
    %10 = arith.maximumf %8, %9 : vector<3x256xf32>
    %11 = vector.extract_strided_slice %1 {offsets = [6, 0], sizes = [3, 256], strides = [1, 1]} : vector<27x256xf32> to vector<3x256xf32>
    %12 = arith.maximumf %10, %11 : vector<3x256xf32>
    %13 = vector.extract_strided_slice %1 {offsets = [9, 0], sizes = [3, 256], strides = [1, 1]} : vector<27x256xf32> to vector<3x256xf32>
    %14 = arith.maximumf %12, %13 : vector<3x256xf32>
    %15 = vector.extract_strided_slice %1 {offsets = [12, 0], sizes = [3, 256], strides = [1, 1]} : vector<27x256xf32> to vector<3x256xf32>
    %16 = arith.maximumf %14, %15 : vector<3x256xf32>
    %17 = vector.extract_strided_slice %1 {offsets = [15, 0], sizes = [3, 256], strides = [1, 1]} : vector<27x256xf32> to vector<3x256xf32>
    %18 = arith.maximumf %16, %17 : vector<3x256xf32>
    %19 = vector.extract_strided_slice %1 {offsets = [18, 0], sizes = [3, 256], strides = [1, 1]} : vector<27x256xf32> to vector<3x256xf32>
    %20 = arith.maximumf %18, %19 : vector<3x256xf32>
    %21 = vector.extract_strided_slice %1 {offsets = [21, 0], sizes = [3, 256], strides = [1, 1]} : vector<27x256xf32> to vector<3x256xf32>
    %22 = arith.maximumf %20, %21 : vector<3x256xf32>
    %23 = vector.extract_strided_slice %1 {offsets = [24, 0], sizes = [3, 256], strides = [1, 1]} : vector<27x256xf32> to vector<3x256xf32>
    %24 = arith.maximumf %22, %23 : vector<3x256xf32>
    %cst_6 = arith.constant dense<0.000000e+00> : vector<13xf32>
    %25 = vector.multi_reduction <add>, %7, %cst_6 [1] : vector<13x256xf32> to vector<13xf32>
    %26 = vector.shape_cast %25 : vector<13xf32> to vector<13x1xf32>
    %27 = arith.mulf %7, %7 : vector<13x256xf32>
    %cst_7 = arith.constant dense<0.000000e+00> : vector<13xf32>
    %28 = vector.multi_reduction <add>, %27, %cst_7 [1] : vector<13x256xf32> to vector<13xf32>
    %29 = vector.shape_cast %28 : vector<13xf32> to vector<13x1xf32>
    %30 = tpu.concatenate %26, %29 in 1 : vector<13x1xf32>, vector<13x1xf32> -> vector<13x2xf32>
    %cst_8 = arith.constant dense<0.000000e+00> : vector<3xf32>
    %31 = vector.multi_reduction <add>, %24, %cst_8 [1] : vector<3x256xf32> to vector<3xf32>
    %32 = vector.shape_cast %31 : vector<3xf32> to vector<3x1xf32>
    %33 = arith.mulf %24, %24 : vector<3x256xf32>
    %cst_9 = arith.constant dense<0.000000e+00> : vector<3xf32>
    %34 = vector.multi_reduction <add>, %33, %cst_9 [1] : vector<3x256xf32> to vector<3xf32>
    %35 = vector.shape_cast %34 : vector<3xf32> to vector<3x1xf32>
    %36 = tpu.concatenate %32, %35 in 1 : vector<3x1xf32>, vector<3x1xf32> -> vector<3x2xf32>
    %37 = tpu.concatenate %30, %36 in 0 : vector<13x2xf32>, vector<3x2xf32> -> vector<16x2xf32>
    %c0_10 = arith.constant 0 : index
    %c0_11 = arith.constant 0 : index
    %c0_12 = arith.constant 0 : index
    %c0_13 = arith.constant 0 : index
    %38 = vector.load %arg4[%c0_10, %c0_11, %c0_12, %c0_13] : memref<1x1x16x2xf32, #tpu.memory_space<vmem>>, vector<1x1x16x2xf32>
    %39 = vector.shape_cast %38 : vector<1x1x16x2xf32> to vector<16x2xf32>
    %40 = vector.shape_cast %37 : vector<16x2xf32> to vector<1x1x16x2xf32>
    tpu.vector_store %arg4[%c0_10, %c0_11, %c0_12, %c0_13], %40 {strides = array<i32>} : memref<1x1x16x2xf32, #tpu.memory_space<vmem>>, vector<1x1x16x2xf32>,
    return
  }
  func.func @transform_0(%arg0: i32, %arg1: i32) -> (i32, i32, i32) {
    %c0_i32 = arith.constant 0 : i32
    %c0_i32_0 = arith.constant 0 : i32
    return %arg0, %c0_i32, %arg1 : i32, i32, i32
  }
  func.func @transform_1(%arg0: i32, %arg1: i32) -> (i32, i32) {
    %c0_i32 = arith.constant 0 : i32
    %c0_i32_0 = arith.constant 0 : i32
    %c0_i32_1 = arith.constant 0 : i32
    return %c0_i32, %c0_i32_0 : i32, i32
  }
  func.func @transform_2(%arg0: i32, %arg1: i32) -> (i32, i32, i32, i32) {
    %c0_i32 = arith.constant 0 : i32
    %c0_i32_0 = arith.constant 0 : i32
    %c0_i32_1 = arith.constant 0 : i32
    return %arg0, %arg1, %c0_i32, %c0_i32_0 : i32, i32, i32, i32
  }
}

module attributes {stable_mosaic.version = 11 : i64} {
  func.func @_apply_kernel(%arg0: i32, %arg1: i32, %arg2: memref<1x27x256xf32, #tpu.memory_space<vmem>>, %arg3: memref<13x27xf32, #tpu.memory_space<vmem>>, %arg4: memref<16x1xf32, #tpu.memory_space<vmem>>, %arg5: memref<16x1xf32, #tpu.memory_space<vmem>>, %arg6: memref<1x16x256xf32, #tpu.memory_space<vmem>>) attributes {dimension_semantics = [#tpu.dimension_semantics<parallel>, #tpu.dimension_semantics<parallel>], iteration_bounds = array<i64: 2, 1>, scalar_prefetch = 0 : i64, scratch_operands = 0 : i64, tpu.core_type = #tpu.core_type<tc>, window_params = [{transform_indices = @transform_0, window_bounds = array<i64: 1, 27, 256>}, {pipeline_mode = #tpu.pipeline_mode<synchronous>, transform_indices = @transform_1, window_bounds = array<i64: 13, 27>}, {pipeline_mode = #tpu.pipeline_mode<synchronous>, transform_indices = @transform_2, window_bounds = array<i64: 16, 1>}, {pipeline_mode = #tpu.pipeline_mode<synchronous>, transform_indices = @transform_3, window_bounds = array<i64: 16, 1>}, {transform_indices = @transform_4, window_bounds = array<i64: 1, 16, 256>}]} {
    %c0 = arith.constant 0 : index
    %c0_0 = arith.constant 0 : index
    %c0_1 = arith.constant 0 : index
    %0 = vector.load %arg2[%c0, %c0_0, %c0_1] : memref<1x27x256xf32, #tpu.memory_space<vmem>>, vector<1x27x256xf32>
    %1 = vector.shape_cast %0 : vector<1x27x256xf32> to vector<27x256xf32>
    %c0_2 = arith.constant 0 : index
    %c0_3 = arith.constant 0 : index
    %2 = vector.load %arg3[%c0_2, %c0_3] : memref<13x27xf32, #tpu.memory_space<vmem>>, vector<13x27xf32>
    %cst = arith.constant 0xFF800000 : f32
    %3 = vector.broadcast %cst : f32 to vector<27x256xf32>
    %4 = arith.cmpf ogt, %1, %3 : vector<27x256xf32>
    %cst_4 = arith.constant 0.000000e+00 : f32
    %5 = vector.broadcast %cst_4 : f32 to vector<27x256xf32>
    %6 = arith.select %4, %1, %5 : vector<27x256xi1>, vector<27x256xf32>
    %cst_5 = arith.constant dense<0.000000e+00> : vector<13x256xf32>
    %7 = tpu.matmul %2, %6, %cst_5 {dimension_numbers = #tpu.dot_dimension_numbers<[1], [0], [0], [1], [0, 0, 1, 1], [], []>} : vector<13x27xf32>, vector<27x256xf32>, vector<13x256xf32> -> vector<13x256xf32>
    %8 = vector.extract_strided_slice %1 {offsets = [0, 0], sizes = [3, 256], strides = [1, 1]} : vector<27x256xf32> to vector<3x256xf32>
    %9 = vector.extract_strided_slice %1 {offsets = [3, 0], sizes = [3, 256], strides = [1, 1]} : vector<27x256xf32> to vector<3x256xf32>
    %10 = arith.maximumf %8, %9 : vector<3x256xf32>
    %11 = vector.extract_strided_slice %1 {offsets = [6, 0], sizes = [3, 256], strides = [1, 1]} : vector<27x256xf32> to vector<3x256xf32>
    %12 = arith.maximumf %10, %11 : vector<3x256xf32>
    %13 = vector.extract_strided_slice %1 {offsets = [9, 0], sizes = [3, 256], strides = [1, 1]} : vector<27x256xf32> to vector<3x256xf32>
    %14 = arith.maximumf %12, %13 : vector<3x256xf32>
    %15 = vector.extract_strided_slice %1 {offsets = [12, 0], sizes = [3, 256], strides = [1, 1]} : vector<27x256xf32> to vector<3x256xf32>
    %16 = arith.maximumf %14, %15 : vector<3x256xf32>
    %17 = vector.extract_strided_slice %1 {offsets = [15, 0], sizes = [3, 256], strides = [1, 1]} : vector<27x256xf32> to vector<3x256xf32>
    %18 = arith.maximumf %16, %17 : vector<3x256xf32>
    %19 = vector.extract_strided_slice %1 {offsets = [18, 0], sizes = [3, 256], strides = [1, 1]} : vector<27x256xf32> to vector<3x256xf32>
    %20 = arith.maximumf %18, %19 : vector<3x256xf32>
    %21 = vector.extract_strided_slice %1 {offsets = [21, 0], sizes = [3, 256], strides = [1, 1]} : vector<27x256xf32> to vector<3x256xf32>
    %22 = arith.maximumf %20, %21 : vector<3x256xf32>
    %23 = vector.extract_strided_slice %1 {offsets = [24, 0], sizes = [3, 256], strides = [1, 1]} : vector<27x256xf32> to vector<3x256xf32>
    %24 = arith.maximumf %22, %23 : vector<3x256xf32>
    %c0_6 = arith.constant 0 : index
    %c0_7 = arith.constant 0 : index
    %25 = vector.load %arg5[%c0_6, %c0_7] : memref<16x1xf32, #tpu.memory_space<vmem>>, vector<13x1xf32>
    %26 = vector.broadcast %25 : vector<13x1xf32> to vector<13x256xf32>
    %27 = arith.addf %7, %26 : vector<13x256xf32>
    %c13 = arith.constant 13 : index
    %c0_8 = arith.constant 0 : index
    %28 = vector.load %arg4[%c13, %c0_8] : memref<16x1xf32, #tpu.memory_space<vmem>>, vector<3x1xf32>
    %29 = vector.broadcast %28 : vector<3x1xf32> to vector<3x256xf32>
    %30 = arith.mulf %24, %29 : vector<3x256xf32>
    %c13_9 = arith.constant 13 : index
    %c0_10 = arith.constant 0 : index
    %31 = vector.load %arg5[%c13_9, %c0_10] : memref<16x1xf32, #tpu.memory_space<vmem>>, vector<3x1xf32>
    %32 = vector.broadcast %31 : vector<3x1xf32> to vector<3x256xf32>
    %33 = arith.addf %30, %32 : vector<3x256xf32>
    %34 = tpu.concatenate %27, %33 in 0 : vector<13x256xf32>, vector<3x256xf32> -> vector<16x256xf32>
    %cst_11 = arith.constant 0.000000e+00 : f32
    %35 = vector.broadcast %cst_11 : f32 to vector<16x256xf32>
    %36 = arith.maximumf %34, %35 : vector<16x256xf32>
    %c0_12 = arith.constant 0 : index
    %c0_13 = arith.constant 0 : index
    %c0_14 = arith.constant 0 : index
    %37 = vector.load %arg6[%c0_12, %c0_13, %c0_14] : memref<1x16x256xf32, #tpu.memory_space<vmem>>, vector<1x16x256xf32>
    %38 = vector.shape_cast %37 : vector<1x16x256xf32> to vector<16x256xf32>
    %39 = vector.shape_cast %36 : vector<16x256xf32> to vector<1x16x256xf32>
    tpu.vector_store %arg6[%c0_12, %c0_13, %c0_14], %39 {strides = array<i32>} : memref<1x16x256xf32, #tpu.memory_space<vmem>>, vector<1x16x256xf32>,
    return
  }
  func.func @transform_0(%arg0: i32, %arg1: i32) -> (i32, i32, i32) {
    %c0_i32 = arith.constant 0 : i32
    %c0_i32_0 = arith.constant 0 : i32
    return %arg0, %c0_i32, %arg1 : i32, i32, i32
  }
  func.func @transform_1(%arg0: i32, %arg1: i32) -> (i32, i32) {
    %c0_i32 = arith.constant 0 : i32
    %c0_i32_0 = arith.constant 0 : i32
    %c0_i32_1 = arith.constant 0 : i32
    return %c0_i32, %c0_i32_0 : i32, i32
  }
  func.func @transform_2(%arg0: i32, %arg1: i32) -> (i32, i32) {
    %c0_i32 = arith.constant 0 : i32
    %c0_i32_0 = arith.constant 0 : i32
    %c0_i32_1 = arith.constant 0 : i32
    return %c0_i32, %c0_i32_0 : i32, i32
  }
  func.func @transform_3(%arg0: i32, %arg1: i32) -> (i32, i32) {
    %c0_i32 = arith.constant 0 : i32
    %c0_i32_0 = arith.constant 0 : i32
    %c0_i32_1 = arith.constant 0 : i32
    return %c0_i32, %c0_i32_0 : i32, i32
  }
  func.func @transform_4(%arg0: i32, %arg1: i32) -> (i32, i32, i32) {
    %c0_i32 = arith.constant 0 : i32
    %c0_i32_0 = arith.constant 0 : i32
    return %arg0, %c0_i32, %arg1 : i32, i32, i32
  }
}

</mosaic_0001>

<llo_original>
// kernel: initial_block.2
$region0: #{initial_block.2}
  #allocation0 [shape = 'u32[]', space=smem, size = 0x4, offset = 0x4, fixed_abs, tag = 'smem constant byte address 0x4 - core index']
  #allocation1 [shape = 'u32[144,128]{1,0:T(1,128)}', space=vmem, size = 0x12000, scoped, tag = 'internal scratch']
  %s0 = inlined_call_operand.vmem [shape: f32[2,27,256], index: 0, kind: input, shape index: {}]
  %s1 = inlined_call_operand.vmem [shape: f32[13,27], index: 1, kind: input, shape index: {}]
  %s2 = inlined_call_operand.vmem [shape: f32[2,1,16,2], index: 2, kind: output, shape index: {}]
  %s3 = sld [smem:[#allocation0]]
  $region41: #{initial_block.2} parent=0
    _
  %s5 = ssub.s32 1, %s3
  %s6 = scalar_select 0, %s5, %s3
  loop: start=0, step=1, limit=4
  $region2: #{initial_block.2} parent=0 // loop_pre_header
    _
  $region3: #{initial_block.2} parent=0 // loop_header
    %s8 = sphi 0, %s12
    %p9 = scmp.ge.s32.totalorder %s8, 4
    %s15 = sphi 0, %s27
    %s16 = sphi 0, %s23
    %s17 = sphi 0, %s15
    %s18 = sphi 0, %s16
    %s19 = sphi 0, %s17
    %s20 = sphi 0, %s18
    %s32 = sphi 0, %s34
    %s35 = sphi 0, %s32
    %s36 = sphi 0, %s35
    %s52 = sphi 0, %s36
    %s56 = sphi 0, %s56
    %s58 = sphi 0, %s56
    %s59 = sphi 0, %s58
    %s73 = sphi 0, %s59
    %s81 = sphi 0, %s83
    %s84 = sphi 0, %s81
    %s85 = sphi 0, %s84
    %s101 = sphi 0, %s85
  $region4: #{initial_block.2} parent=0 // loop_header_branch
    %11 = sbr.rel (%p9) target = $region8
  $region5: #{initial_block.2} parent=0 // loop_body
    %s13 = ssub.s32 %s8, 1
    %s14 = ssub.s32 %s8, 2
    %s21 = sadd.s32 1, %s16
    %p22 = scmp.ge.s32.totalorder %s21, 1
    %s23 = scalar_select %p22, 0, %s21
    %s24 = sadd.s32 1, %s15
    %s25 = scalar_select %p22, %s24, %s15
    %p26 = scmp.ge.s32.totalorder %s25, 2
    %s27 = scalar_select %p26, 0, %s25
    %s28 = ssub.s32 %s15, %s27
    %s29 = ssub.s32 %s16, %s23
    %s30 = sor.u32 %s28, %s29
    %p31 = scmp.eq.s32.totalorder %s30, 0
    %s33 = sadd.s32 %s32, 1
    %s34 = scalar_select %p31, %s32, %s33
    %p37 = pneg %p31
    %p38 = scmp.eq.s32.totalorder %s8, 1
    %p39 = por %p37, %p38
    %p40 = scmp.ne.s32.totalorder %s32, %s35
    %p41 = scmp.eq.s32.totalorder %s8, 0
    %p42 = por %p40, %p41
    %p43 = scmp.ne.s32.totalorder %s32, %s35
    %p44 = scmp.eq.s32.totalorder %s13, 1
    %p45 = por %p43, %p44
    %p46 = scmp.ne.s32.totalorder %s35, %s36
    %p47 = scmp.eq.s32.totalorder %s13, 0
    %p48 = por %p46, %p47
    %p49 = scmp.ne.s32.totalorder %s35, %s36
    %p50 = scmp.eq.s32.totalorder %s14, 1
    %p51 = por %p49, %p50
    %p53 = scmp.ne.s32.totalorder %s36, %s52
    %p54 = scmp.eq.s32.totalorder %s14, 0
    %p55 = por %p53, %p54
    %s57 = sadd.s32 %s56, 1
    %p60 = scmp.eq.s32.totalorder %s8, 1
    %p61 = scmp.ne.s32.totalorder %s56, %s58
    %p62 = scmp.eq.s32.totalorder %s8, 0
    %p63 = por %p61, %p62
    %p64 = scmp.ne.s32.totalorder %s56, %s58
    %p65 = scmp.eq.s32.totalorder %s13, 1
    %p66 = por %p64, %p65
    %p67 = scmp.ne.s32.totalorder %s58, %s59
    %p68 = scmp.eq.s32.totalorder %s13, 0
    %p69 = por %p67, %p68
    %p70 = scmp.ne.s32.totalorder %s58, %s59
    %p71 = scmp.eq.s32.totalorder %s14, 1
    %p72 = por %p70, %p71
    %p74 = scmp.ne.s32.totalorder %s59, %s73
    %p75 = scmp.eq.s32.totalorder %s14, 0
    %p76 = por %p74, %p75
    %s77 = ssub.s32 %s15, %s27
    %s78 = ssub.s32 %s16, %s23
    %s79 = sor.u32 %s77, %s78
    %p80 = scmp.eq.s32.totalorder %s79, 0
    %s82 = sadd.s32 %s81, 1
    %s83 = scalar_select %p80, %s81, %s82
    %p86 = pneg %p80
    %p87 = scmp.eq.s32.totalorder %s8, 1
    %p88 = por %p86, %p87
    %p89 = scmp.ne.s32.totalorder %s81, %s84
    %p90 = scmp.eq.s32.totalorder %s8, 0
    %p91 = por %p89, %p90
    %p92 = scmp.ne.s32.totalorder %s81, %s84
    %p93 = scmp.eq.s32.totalorder %s13, 1
    %p94 = por %p92, %p93
    %p95 = scmp.ne.s32.totalorder %s84, %s85
    %p96 = scmp.eq.s32.totalorder %s13, 0
    %p97 = por %p95, %p96
    %p98 = scmp.ne.s32.totalorder %s84, %s85
    %p99 = scmp.eq.s32.totalorder %s14, 1
    %p100 = por %p98, %p99
    %p102 = scmp.ne.s32.totalorder %s85, %s101
    %p103 = scmp.eq.s32.totalorder %s14, 0
    %p104 = por %p102, %p103
    %p105 = scmp.le.s32.totalorder 1, %s8
    %p106 = scmp.lt.s32.totalorder %s8, 3
    %p107 = pnand %p105, %p106
    %p108 = pneg %p107
    // Predicated region
    $region9: #{initial_block.2} parent=5 // pred_check
      _
    $region10: #{initial_block.2} parent=5 // pred_check_branch
      %110 = sbr.rel (%p107) target = $region12
    $region11: #{initial_block.2} parent=5 // pred_region
      %s111 = ssub.s32 %s8, 1
      // Predicated region
      $region13: #{initial_block.2} parent=11 // pred_check
        %p112 = pneg %p69
      $region14: #{initial_block.2} parent=11 // pred_check_branch
        %114 = sbr.rel (%p112) target = $region16
      $region15: #{initial_block.2} parent=11 // pred_region
        _
      $region16: #{initial_block.2} parent=11 // pred_fallthru
        _
    $region12: #{initial_block.2} parent=5 // pred_fallthru
      _
    %p115 = scmp.lt.s32.totalorder %s8, 2
    // Predicated region
    $region17: #{initial_block.2} parent=5 // pred_check
      %p116 = pneg %p115
    $region18: #{initial_block.2} parent=5 // pred_check_branch
      %118 = sbr.rel (%p116) target = $region20
    $region19: #{initial_block.2} parent=5 // pred_region
      // Predicated region
      $region21: #{initial_block.2} parent=19 // pred_check
        %p119 = pneg %p42
      $region22: #{initial_block.2} parent=19 // pred_check_branch
        %121 = sbr.rel (%p119) target = $region24
      $region23: #{initial_block.2} parent=19 // pred_region
        %s122 = smul.u32 2, %s16
        %p123 = scmp.lt.s32.totalorder %s15, 1
        %s124 = scalar_select %p123, %s15, 1
        %p125 = scmp.lt.s32.totalorder %s122, 1
        %s126 = scalar_select %p125, %s122, 1
        %s127 = smul.addr %s124, 8
        %s128 = sadd.s32 %s126, %s127
        %s129 = smul.addr %s128, 8
        %s130 = scalar_lea.vmem %s0, %s129
        %s131 = smul.u32 2, %s16
      $region24: #{initial_block.2} parent=19 // pred_fallthru
        _
    $region20: #{initial_block.2} parent=5 // pred_fallthru
      _
    %p132 = scmp.le.s32.totalorder 1, %s8
    %p133 = scmp.lt.s32.totalorder %s8, 3
    %p134 = pnand %p132, %p133
    %p135 = pneg %p134
    // Predicated region
    $region25: #{initial_block.2} parent=5 // pred_check
      _
    $region26: #{initial_block.2} parent=5 // pred_check_branch
      %137 = sbr.rel (%p134) target = $region28
    $region27: #{initial_block.2} parent=5 // pred_region
      %s138 = ssub.s32 %s8, 1
      %s139 = smul.u32 2, %s18
      %p140 = scmp.lt.s32.totalorder %s17, 1
      %s141 = scalar_select %p140, %s17, 1
      %p142 = scmp.lt.s32.totalorder %s139, 1
      %s143 = scalar_select %p142, %s139, 1
      %s144 = smul.addr %s141, 8
      %s145 = sadd.s32 %s143, %s144
      %s146 = smul.addr %s145, 8
      %s147 = scalar_lea.vmem %s0, %s146
      %p148 = pneg %p48
      %p149 = pneg %p45
      %p150 = pneg %p69
      %p151 = pneg %p66
      %p152 = pneg %p97
      %p153 = pneg %p94
      %p154 = scmp.lt.s32.totalorder %s17, 1
      %s155 = scalar_select %p154, %s17, 1
      %p156 = scmp.lt.s32.totalorder %s18, 0
      %s157 = scalar_select %p156, %s18, 0
      %s158 = smul.addr %s157, 2
      %s159 = smul.addr %s155, 2
      %s160 = sadd.s32 %s158, %s159
      %s161 = smul.addr %s160, 8
      %s162 = scalar_lea.vmem %s2, %s161
      %s163 = smul.u32 2, %s18
      %p164 = scmp.lt.s32.totalorder %s17, 1
      %s165 = scalar_select %p164, %s17, 1
      %p166 = scmp.lt.s32.totalorder %s163, 1
      %s167 = scalar_select %p166, %s163, 1
      %s168 = smul.addr %s165, 8
      %s169 = sadd.s32 %s167, %s168
      %s170 = smul.addr %s169, 8
      %s171 = scalar_lea.vmem %s0, %s170
      %s172 = smul.u32 2, %s18
      %p173 = scmp.lt.s32.totalorder %s17, 1
      %s174 = scalar_select %p173, %s17, 1
      %p175 = scmp.lt.s32.totalorder %s18, 0
      %s176 = scalar_select %p175, %s18, 0
      %s177 = smul.addr %s176, 2
      %s178 = smul.addr %s174, 2
      %s179 = sadd.s32 %s177, %s178
      %s180 = smul.addr %s179, 8
      %s181 = scalar_lea.vmem %s2, %s180
      %v182 = vld [vmem:[%s171] sm:$0xff]
      %v183 = vld [vmem:[%s171 + $0x8] sm:$0xff]
      %v184 = vld [vmem:[%s171 + $0x10] sm:$0xff]
      %v185 = vld [vmem:[%s171 + $0x18] sm:$0xff]
      %v186 = vld [vmem:[%s171 + $0x20] sm:$0xff]
      %v187 = vld [vmem:[%s171 + $0x28] sm:$0xff]
      %v188 = vld [vmem:[%s171 + $0x30] sm:$0x7]
      %v189 = vld [vmem:[%s171 + $0x38] sm:$0x7]
      %v190 = vld [vmem:[%s1] sm:$0xff]
      %v191 = vld [vmem:[%s1 + $0x8] sm:$0x1f]
      %vm192 = vcmp.gt.f32.partialorder %v182, -inf
      %vm193 = vcmp.gt.f32.partialorder %v183, -inf
      %vm194 = vcmp.gt.f32.partialorder %v184, -inf
      %vm195 = vcmp.gt.f32.partialorder %v185, -inf
      %vm196 = vcmp.gt.f32.partialorder %v186, -inf
      %vm197 = vcmp.gt.f32.partialorder %v187, -inf
      %vm198 = vcmp.gt.f32.partialorder %v188, -inf
      %vm199 = vcmp.gt.f32.partialorder %v189, -inf
      %v200 = vsel %vm192, %v182, 0.0
      %v201 = vsel %vm193, %v183, 0.0
      %v202 = vsel %vm194, %v184, 0.0
      %v203 = vsel %vm195, %v185, 0.0
      %v204 = vsel %vm196, %v186, 0.0
      %v205 = vsel %vm197, %v187, 0.0
      %v206 = vsel %vm198, %v188, 0.0
      %v207 = vsel %vm199, %v189, 0.0
      %vm208 = vcmask 220160
      %v210 = vsel %vm208, %v190, 0
      %v213 = vsel %vm208, %v191, 0
      %vm215 = vcmask 1042432
      %v217 = vsel %vm215, %v206, 0
      %v220 = vsel %vm215, %v207, 0
      %222 = vmatprep.subr.mxu0 0.0
      %223 = vmatpush1.msra.mxu0 0.0
      %224 = vmatprep.subr.mxu0 0.0
      %225 = vmatpush1.msra.mxu0 0.0
      %226 = vmatprep.subr.mxu0 0.0
      %227 = vmatpush1.msra.mxu0 0.0
      %228 = vmatprep.subr.mxu0 0.0
      %229 = vmatpush1.msra.mxu0 0.0
      %230 = vmatprep.subr.mxu0 0.0
      %231 = vmatpush1.msra.mxu0 0.0
      %232 = vmatprep.subr.mxu0 0.0
      %233 = vmatpush1.msra.mxu0 0.0
      %234 = vmatprep.subr.mxu0 0.0
      %235 = vmatpush1.msra.mxu0 0.0
      %236 = vmatprep.subr.mxu0 0.0
      %237 = vmatpush1.msra.mxu0 0.0
      %238 = vmatprep.subr.mxu0 0.0
      %239 = vmatpush1.msra.mxu0 0.0
      %240 = vmatprep.subr.mxu0 0.0
      %241 = vmatpush1.msra.mxu0 0.0
      %242 = vmatprep.subr.mxu0 0.0
      %243 = vmatpush1.msra.mxu0 0.0
      %244 = vmatprep.subr.mxu0 0.0
      %245 = vmatpush1.msra.mxu0 0.0
      %246 = vmatprep.subr.mxu0 %v220
      %247 = vmatpush1.msra.mxu0 %v217
      %248 = vmatprep.subr.mxu0 %v205
      %249 = vmatpush1.msra.mxu0 %v204
      %250 = vmatprep.subr.mxu0 %v203
      %251 = vmatpush1.msra.mxu0 %v202
      %252 = vmatprep.subr.mxu0 %v201
      %253 = vmatpush1.msra.mxu0 %v200
      %254 = vmatprep.subr.mxu0 0.0
      %255 = vmatpush2.msra.mxu0 0.0
      %256 = vmatprep.subr.mxu0 0.0
      %257 = vmatpush2.msra.mxu0 0.0
      %258 = vmatprep.subr.mxu0 0.0
      %259 = vmatpush2.msra.mxu0 0.0
      %260 = vmatprep.subr.mxu0 0.0
      %261 = vmatpush2.msra.mxu0 0.0
      %262 = vmatprep.subr.mxu0 0.0
      %263 = vmatpush2.msra.mxu0 0.0
      %264 = vmatprep.subr.mxu0 0.0
      %265 = vmatpush2.msra.mxu0 0.0
      %266 = vmatprep.subr.mxu0 0.0
      %267 = vmatpush2.msra.mxu0 0.0
      %268 = vmatprep.subr.mxu0 0.0
      %269 = vmatpush2.msra.mxu0 0.0
      %270 = vmatprep.subr.mxu0 0.0
      %271 = vmatpush2.msra.mxu0 0.0
      %272 = vmatprep.subr.mxu0 0.0
      %273 = vmatpush2.msra.mxu0 0.0
      %274 = vmatprep.subr.mxu0 0.0
      %275 = vmatpush2.msra.mxu0 0.0
      %276 = vmatprep.subr.mxu0 0.0
      %277 = vmatpush2.msra.mxu0 0.0
      %278 = vmatprep.subr.mxu0 0.0
      %279 = vmatpush2.msra.mxu0 0.0
      %280 = vmatprep.subr.mxu0 0.0
      %281 = vmatpush2.msra.mxu0 0.0
      %282 = vmatprep.subr.mxu0 0.0
      %283 = vmatpush2.msra.mxu0 0.0
      %284 = vmatprep.subr.mxu0 0.0
      %285 = vmatpush2.msra.mxu0 0.0
      %286 = vmatprep.mubr.f32.mxu0 0.0
      %287 = vmatmul.mubr.f32.gmra.mxu0 %v210
      %v288 = vpop.f32.mrf.mxu0
      %v289 = vadd.f32 0.0, %v288
      %v290 = vpop.f32.mrf.mxu0
      %v291 = vadd.f32 0.0, %v290
      %292 = vmatprep.mubr.f32.mxu0 0.0
      %293 = vmatmul.mubr.f32.gmra.mxu0 %v213
      %v294 = vpop.f32.mrf.mxu0
      %v295 = vadd.f32 0.0, %v294
      %v296 = vpop.f32.mrf.mxu0
      %v297 = vadd.f32 0.0, %v296
      %298 = vdwg.mxu0
      %v301 = vrot.slane %v182, 3
      %v302 = vrot.slane %v183, 3
      %v305 = vmax.f32 %v182, %v301
      %v306 = vmax.f32 %v183, %v302
      %vm309 = vcmask 1041408
      %v310 = vrot.slane %v182, 6
      %v311 = vrot.slane %v184, 6
      %v312 = vsel %vm309, %v310, %v311
      %v313 = vrot.slane %v183, 6
      %v314 = vrot.slane %v185, 6
      %v315 = vsel %vm309, %v313, %v314
      %v318 = vmax.f32 %v305, %v312
      %v319 = vmax.f32 %v306, %v315
      %v320 = vrot.slane %v184, 1
      %v321 = vrot.slane %v185, 1
      %v324 = vmax.f32 %v318, %v320
      %v325 = vmax.f32 %v319, %v321
      %v326 = vrot.slane %v184, 4
      %v327 = vrot.slane %v185, 4
      %v330 = vmax.f32 %v324, %v326
      %v331 = vmax.f32 %v325, %v327
      %vm334 = vcmask 1040384
      %v335 = vrot.slane %v184, 7
      %v336 = vrot.slane %v186, 7
      %v337 = vsel %vm334, %v335, %v336
      %v338 = vrot.slane %v185, 7
      %v339 = vrot.slane %v187, 7
      %v340 = vsel %vm334, %v338, %v339
      %v343 = vmax.f32 %v330, %v337
      %v344 = vmax.f32 %v331, %v340
      %v345 = vrot.slane %v186, 2
      %v346 = vrot.slane %v187, 2
      %v349 = vmax.f32 %v343, %v345
      %v350 = vmax.f32 %v344, %v346
      %v351 = vrot.slane %v186, 5
      %v352 = vrot.slane %v187, 5
      %v355 = vmax.f32 %v349, %v351
      %v356 = vmax.f32 %v350, %v352
      %v357 = vmax.f32 %v355, %v188
      %v358 = vmax.f32 %v356, %v189
      %v359 = vadd.f32 %v289, %v291
      %360 = vadd.xlane.f32.xlu0 %v359
      %v361 = vpop.xlane.xlu0 %360
      %vm362 = vcmask 1044480
      %v363 = vsel %vm362, %v295, 0.0
      %v364 = vsel %vm362, %v297, 0.0
      %v365 = vadd.f32 %v363, %v364
      %366 = vadd.xlane.f32.xlu0 %v365
      %v367 = vpop.xlane.xlu0 %366
      %v368 = vmul.f32 %v289, %v289
      %v369 = vmul.f32 %v291, %v291
      %v370 = vmul.f32 %v295, %v295
      %v371 = vmul.f32 %v297, %v297
      %v372 = vadd.f32 %v368, %v369
      %373 = vadd.xlane.f32.xlu0 %v372
      %v374 = vpop.xlane.xlu0 %373
      %v375 = vsel %vm362, %v370, 0.0
      %v376 = vsel %vm362, %v371, 0.0
      %v377 = vadd.f32 %v375, %v376
      %378 = vadd.xlane.f32.xlu0 %v377
      %v379 = vpop.xlane.xlu0 %378
      %vm380 = vcmask 7168
      %v381 = vsel %vm380, %v361, %v374
      %v382 = vsel %vm380, %v367, %v379
      %v383 = vsel %vm215, %v357, 0.0
      %v384 = vsel %vm215, %v358, 0.0
      %v385 = vadd.f32 %v383, %v384
      %386 = vadd.xlane.f32.xlu0 %v385
      %v387 = vpop.xlane.xlu0 %386
      %v388 = vmul.f32 %v357, %v357
      %v389 = vmul.f32 %v358, %v358
      %v390 = vsel %vm215, %v388, 0.0
      %v391 = vsel %vm215, %v389, 0.0
      %v392 = vadd.f32 %v390, %v391
      %393 = vadd.xlane.f32.xlu0 %v392
      %v394 = vpop.xlane.xlu0 %393
      %v395 = vsel %vm380, %v387, %v394
      %v397 = vrot.slane %v395, 3
      %v399 = vsel %vm362, %v382, %v397
      %vm400 = vcmask 15360
      %401 = vst.msk [vmem:[%s181] sm:$0xff] %vm400, %v381
      %402 = vst.msk [vmem:[%s181 + $0x8] sm:$0xff] %vm400, %v399
      %p403 = scmp.lt.s32.totalorder %s17, 1
      %s404 = scalar_select %p403, %s17, 1
      %p405 = scmp.lt.s32.totalorder %s18, 0
      %s406 = scalar_select %p405, %s18, 0
      %s407 = smul.addr %s406, 2
      %s408 = smul.addr %s404, 2
      %s409 = sadd.s32 %s407, %s408
      %s410 = smul.addr %s409, 8
      %s411 = scalar_lea.vmem %s2, %s410
      // Predicated region
      $region29: #{initial_block.2} parent=27 // pred_check
        %p412 = pneg %p94
      $region30: #{initial_block.2} parent=27 // pred_check_branch
        %414 = sbr.rel (%p412) target = $region32
      $region31: #{initial_block.2} parent=27 // pred_region
        _
      $region32: #{initial_block.2} parent=27 // pred_fallthru
        _
    $region28: #{initial_block.2} parent=5 // pred_fallthru
      _
    %p415 = scmp.le.s32.totalorder 2, %s8
    // Predicated region
    $region33: #{initial_block.2} parent=5 // pred_check
      %p416 = pneg %p415
    $region34: #{initial_block.2} parent=5 // pred_check_branch
      %418 = sbr.rel (%p416) target = $region36
    $region35: #{initial_block.2} parent=5 // pred_region
      %s419 = ssub.s32 %s8, 2
      // Predicated region
      $region37: #{initial_block.2} parent=35 // pred_check
        %p420 = pneg %p100
      $region38: #{initial_block.2} parent=35 // pred_check_branch
        %422 = sbr.rel (%p420) target = $region40
      $region39: #{initial_block.2} parent=35 // pred_region
        %p423 = scmp.lt.s32.totalorder %s19, 1
        %s424 = scalar_select %p423, %s19, 1
        %p425 = scmp.lt.s32.totalorder %s20, 0
        %s426 = scalar_select %p425, %s20, 0
        %s427 = smul.addr %s426, 2
        %s428 = smul.addr %s424, 2
        %s429 = sadd.s32 %s427, %s428
        %s430 = smul.addr %s429, 8
        %s431 = scalar_lea.vmem %s2, %s430
      $region40: #{initial_block.2} parent=35 // pred_fallthru
        _
    $region36: #{initial_block.2} parent=5 // pred_fallthru
      _
  $region6: #{initial_block.2} parent=0 // loop_footer
    %s12 = sadd.s32 1, %s8
  $region7: #{initial_block.2} parent=0 // loop_footer_branch
    %7 = sbr.rel target = $region3
  $region8: #{initial_block.2} parent=0 // loop_exit
    _

// kernel: initial_block.3
$region0: #{initial_block.3}
  #allocation0 [shape = 'u32[]', space=smem, size = 0x4, offset = 0x4, fixed_abs, tag = 'smem constant byte address 0x4 - core index']
  #allocation1 [shape = 'u32[144,128]{1,0:T(1,128)}', space=vmem, size = 0x12000, scoped, tag = 'internal scratch']
  %s0 = inlined_call_operand.vmem [shape: f32[2,27,256], index: 0, kind: input, shape index: {}]
  %s1 = inlined_call_operand.vmem [shape: f32[13,27], index: 1, kind: input, shape index: {}]
  %s2 = inlined_call_operand.vmem [shape: f32[16,1], index: 2, kind: input, shape index: {}]
  %s3 = inlined_call_operand.vmem [shape: f32[16,1], index: 3, kind: input, shape index: {}]
  %s4 = inlined_call_operand.vmem [shape: f32[2,16,256], index: 4, kind: output, shape index: {}]
  %s5 = sld [smem:[#allocation0]]
  $region49: #{initial_block.3} parent=0
    _
  %s7 = ssub.s32 1, %s5
  %s8 = scalar_select 0, %s7, %s5
  loop: start=0, step=1, limit=4
  $region2: #{initial_block.3} parent=0 // loop_pre_header
    _
  $region3: #{initial_block.3} parent=0 // loop_header
    %s10 = sphi 0, %s14
    %p11 = scmp.ge.s32.totalorder %s10, 4
    %s17 = sphi 0, %s29
    %s18 = sphi 0, %s25
    %s19 = sphi 0, %s17
    %s20 = sphi 0, %s18
    %s21 = sphi 0, %s19
    %s22 = sphi 0, %s20
    %s34 = sphi 0, %s36
    %s37 = sphi 0, %s34
    %s38 = sphi 0, %s37
    %s54 = sphi 0, %s38
    %s58 = sphi 0, %s58
    %s60 = sphi 0, %s58
    %s61 = sphi 0, %s60
    %s75 = sphi 0, %s61
    %s79 = sphi 0, %s79
    %s81 = sphi 0, %s79
    %s82 = sphi 0, %s81
    %s96 = sphi 0, %s82
    %s100 = sphi 0, %s100
    %s102 = sphi 0, %s100
    %s103 = sphi 0, %s102
    %s117 = sphi 0, %s103
    %s125 = sphi 0, %s127
    %s128 = sphi 0, %s125
    %s129 = sphi 0, %s128
    %s145 = sphi 0, %s129
  $region4: #{initial_block.3} parent=0 // loop_header_branch
    %13 = sbr.rel (%p11) target = $region8
  $region5: #{initial_block.3} parent=0 // loop_body
    %s15 = ssub.s32 %s10, 1
    %s16 = ssub.s32 %s10, 2
    %s23 = sadd.s32 1, %s18
    %p24 = scmp.ge.s32.totalorder %s23, 1
    %s25 = scalar_select %p24, 0, %s23
    %s26 = sadd.s32 1, %s17
    %s27 = scalar_select %p24, %s26, %s17
    %p28 = scmp.ge.s32.totalorder %s27, 2
    %s29 = scalar_select %p28, 0, %s27
    %s30 = ssub.s32 %s17, %s29
    %s31 = ssub.s32 %s18, %s25
    %s32 = sor.u32 %s30, %s31
    %p33 = scmp.eq.s32.totalorder %s32, 0
    %s35 = sadd.s32 %s34, 1
    %s36 = scalar_select %p33, %s34, %s35
    %p39 = pneg %p33
    %p40 = scmp.eq.s32.totalorder %s10, 1
    %p41 = por %p39, %p40
    %p42 = scmp.ne.s32.totalorder %s34, %s37
    %p43 = scmp.eq.s32.totalorder %s10, 0
    %p44 = por %p42, %p43
    %p45 = scmp.ne.s32.totalorder %s34, %s37
    %p46 = scmp.eq.s32.totalorder %s15, 1
    %p47 = por %p45, %p46
    %p48 = scmp.ne.s32.totalorder %s37, %s38
    %p49 = scmp.eq.s32.totalorder %s15, 0
    %p50 = por %p48, %p49
    %p51 = scmp.ne.s32.totalorder %s37, %s38
    %p52 = scmp.eq.s32.totalorder %s16, 1
    %p53 = por %p51, %p52
    %p55 = scmp.ne.s32.totalorder %s38, %s54
    %p56 = scmp.eq.s32.totalorder %s16, 0
    %p57 = por %p55, %p56
    %s59 = sadd.s32 %s58, 1
    %p62 = scmp.eq.s32.totalorder %s10, 1
    %p63 = scmp.ne.s32.totalorder %s58, %s60
    %p64 = scmp.eq.s32.totalorder %s10, 0
    %p65 = por %p63, %p64
    %p66 = scmp.ne.s32.totalorder %s58, %s60
    %p67 = scmp.eq.s32.totalorder %s15, 1
    %p68 = por %p66, %p67
    %p69 = scmp.ne.s32.totalorder %s60, %s61
    %p70 = scmp.eq.s32.totalorder %s15, 0
    %p71 = por %p69, %p70
    %p72 = scmp.ne.s32.totalorder %s60, %s61
    %p73 = scmp.eq.s32.totalorder %s16, 1
    %p74 = por %p72, %p73
    %p76 = scmp.ne.s32.totalorder %s61, %s75
    %p77 = scmp.eq.s32.totalorder %s16, 0
    %p78 = por %p76, %p77
    %s80 = sadd.s32 %s79, 1
    %p83 = scmp.eq.s32.totalorder %s10, 1
    %p84 = scmp.ne.s32.totalorder %s79, %s81
    %p85 = scmp.eq.s32.totalorder %s10, 0
    %p86 = por %p84, %p85
    %p87 = scmp.ne.s32.totalorder %s79, %s81
    %p88 = scmp.eq.s32.totalorder %s15, 1
    %p89 = por %p87, %p88
    %p90 = scmp.ne.s32.totalorder %s81, %s82
    %p91 = scmp.eq.s32.totalorder %s15, 0
    %p92 = por %p90, %p91
    %p93 = scmp.ne.s32.totalorder %s81, %s82
    %p94 = scmp.eq.s32.totalorder %s16, 1
    %p95 = por %p93, %p94
    %p97 = scmp.ne.s32.totalorder %s82, %s96
    %p98 = scmp.eq.s32.totalorder %s16, 0
    %p99 = por %p97, %p98
    %s101 = sadd.s32 %s100, 1
    %p104 = scmp.eq.s32.totalorder %s10, 1
    %p105 = scmp.ne.s32.totalorder %s100, %s102
    %p106 = scmp.eq.s32.totalorder %s10, 0
    %p107 = por %p105, %p106
    %p108 = scmp.ne.s32.totalorder %s100, %s102
    %p109 = scmp.eq.s32.totalorder %s15, 1
    %p110 = por %p108, %p109
    %p111 = scmp.ne.s32.totalorder %s102, %s103
    %p112 = scmp.eq.s32.totalorder %s15, 0
    %p113 = por %p111, %p112
    %p114 = scmp.ne.s32.totalorder %s102, %s103
    %p115 = scmp.eq.s32.totalorder %s16, 1
    %p116 = por %p114, %p115
    %p118 = scmp.ne.s32.totalorder %s103, %s117
    %p119 = scmp.eq.s32.totalorder %s16, 0
    %p120 = por %p118, %p119
    %s121 = ssub.s32 %s17, %s29
    %s122 = ssub.s32 %s18, %s25
    %s123 = sor.u32 %s121, %s122
    %p124 = scmp.eq.s32.totalorder %s123, 0
    %s126 = sadd.s32 %s125, 1
    %s127 = scalar_select %p124, %s125, %s126
    %p130 = pneg %p124
    %p131 = scmp.eq.s32.totalorder %s10, 1
    %p132 = por %p130, %p131
    %p133 = scmp.ne.s32.totalorder %s125, %s128
    %p134 = scmp.eq.s32.totalorder %s10, 0
    %p135 = por %p133, %p134
    %p136 = scmp.ne.s32.totalorder %s125, %s128
    %p137 = scmp.eq.s32.totalorder %s15, 1
    %p138 = por %p136, %p137
    %p139 = scmp.ne.s32.totalorder %s128, %s129
    %p140 = scmp.eq.s32.totalorder %s15, 0
    %p141 = por %p139, %p140
    %p142 = scmp.ne.s32.totalorder %s128, %s129
    %p143 = scmp.eq.s32.totalorder %s16, 1
    %p144 = por %p142, %p143
    %p146 = scmp.ne.s32.totalorder %s129, %s145
    %p147 = scmp.eq.s32.totalorder %s16, 0
    %p148 = por %p146, %p147
    %p149 = scmp.le.s32.totalorder 1, %s10
    %p150 = scmp.lt.s32.totalorder %s10, 3
    %p151 = pnand %p149, %p150
    %p152 = pneg %p151
    // Predicated region
    $region9: #{initial_block.3} parent=5 // pred_check
      _
    $region10: #{initial_block.3} parent=5 // pred_check_branch
      %154 = sbr.rel (%p151) target = $region12
    $region11: #{initial_block.3} parent=5 // pred_region
      %s155 = ssub.s32 %s10, 1
      // Predicated region
      $region13: #{initial_block.3} parent=11 // pred_check
        %p156 = pneg %p71
      $region14: #{initial_block.3} parent=11 // pred_check_branch
        %158 = sbr.rel (%p156) target = $region16
      $region15: #{initial_block.3} parent=11 // pred_region
        _
      $region16: #{initial_block.3} parent=11 // pred_fallthru
        _
      // Predicated region
      $region17: #{initial_block.3} parent=11 // pred_check
        %p159 = pneg %p92
      $region18: #{initial_block.3} parent=11 // pred_check_branch
        %161 = sbr.rel (%p159) target = $region20
      $region19: #{initial_block.3} parent=11 // pred_region
        _
      $region20: #{initial_block.3} parent=11 // pred_fallthru
        _
      // Predicated region
      $region21: #{initial_block.3} parent=11 // pred_check
        %p162 = pneg %p113
      $region22: #{initial_block.3} parent=11 // pred_check_branch
        %164 = sbr.rel (%p162) target = $region24
      $region23: #{initial_block.3} parent=11 // pred_region
        _
      $region24: #{initial_block.3} parent=11 // pred_fallthru
        _
    $region12: #{initial_block.3} parent=5 // pred_fallthru
      _
    %p165 = scmp.lt.s32.totalorder %s10, 2
    // Predicated region
    $region25: #{initial_block.3} parent=5 // pred_check
      %p166 = pneg %p165
    $region26: #{initial_block.3} parent=5 // pred_check_branch
      %168 = sbr.rel (%p166) target = $region28
    $region27: #{initial_block.3} parent=5 // pred_region
      // Predicated region
      $region29: #{initial_block.3} parent=27 // pred_check
        %p169 = pneg %p44
      $region30: #{initial_block.3} parent=27 // pred_check_branch
        %171 = sbr.rel (%p169) target = $region32
      $region31: #{initial_block.3} parent=27 // pred_region
        %s172 = smul.u32 2, %s18
        %p173 = scmp.lt.s32.totalorder %s17, 1
        %s174 = scalar_select %p173, %s17, 1
        %p175 = scmp.lt.s32.totalorder %s172, 1
        %s176 = scalar_select %p175, %s172, 1
        %s177 = smul.addr %s174, 8
        %s178 = sadd.s32 %s176, %s177
        %s179 = smul.addr %s178, 8
        %s180 = scalar_lea.vmem %s0, %s179
        %s181 = smul.u32 2, %s18
      $region32: #{initial_block.3} parent=27 // pred_fallthru
        _
    $region28: #{initial_block.3} parent=5 // pred_fallthru
      _
    %p182 = scmp.le.s32.totalorder 1, %s10
    %p183 = scmp.lt.s32.totalorder %s10, 3
    %p184 = pnand %p182, %p183
    %p185 = pneg %p184
    // Predicated region
    $region33: #{initial_block.3} parent=5 // pred_check
      _
    $region34: #{initial_block.3} parent=5 // pred_check_branch
      %187 = sbr.rel (%p184) target = $region36
    $region35: #{initial_block.3} parent=5 // pred_region
      %s188 = ssub.s32 %s10, 1
      %s189 = smul.u32 2, %s20
      %p190 = scmp.lt.s32.totalorder %s19, 1
      %s191 = scalar_select %p190, %s19, 1
      %p192 = scmp.lt.s32.totalorder %s189, 1
      %s193 = scalar_select %p192, %s189, 1
      %s194 = smul.addr %s191, 8
      %s195 = sadd.s32 %s193, %s194
      %s196 = smul.addr %s195, 8
      %s197 = scalar_lea.vmem %s0, %s196
      %p198 = pneg %p50
      %p199 = pneg %p47
      %p200 = pneg %p71
      %p201 = pneg %p68
      %p202 = pneg %p92
      %p203 = pneg %p89
      %p204 = pneg %p113
      %p205 = pneg %p110
      %p206 = pneg %p141
      %p207 = pneg %p138
      %s208 = smul.u32 2, %s20
      %p209 = scmp.lt.s32.totalorder %s19, 1
      %s210 = scalar_select %p209, %s19, 1
      %p211 = scmp.lt.s32.totalorder %s208, 1
      %s212 = scalar_select %p211, %s208, 1
      %s213 = smul.addr %s210, 4
      %s214 = sadd.s32 %s212, %s213
      %s215 = smul.addr %s214, 8
      %s216 = scalar_lea.vmem %s4, %s215
      %s217 = smul.u32 2, %s20
      %p218 = scmp.lt.s32.totalorder %s19, 1
      %s219 = scalar_select %p218, %s19, 1
      %p220 = scmp.lt.s32.totalorder %s217, 1
      %s221 = scalar_select %p220, %s217, 1
      %s222 = smul.addr %s219, 8
      %s223 = sadd.s32 %s221, %s222
      %s224 = smul.addr %s223, 8
      %s225 = scalar_lea.vmem %s0, %s224
      %s226 = smul.u32 2, %s20
      %s227 = smul.u32 2, %s20
      %p228 = scmp.lt.s32.totalorder %s19, 1
      %s229 = scalar_select %p228, %s19, 1
      %p230 = scmp.lt.s32.totalorder %s227, 1
      %s231 = scalar_select %p230, %s227, 1
      %s232 = smul.addr %s229, 4
      %s233 = sadd.s32 %s231, %s232
      %s234 = smul.addr %s233, 8
      %s235 = scalar_lea.vmem %s4, %s234
      %s236 = smul.u32 2, %s20
      %v237 = vld [vmem:[%s225] sm:$0xff]
      %v238 = vld [vmem:[%s225 + $0x8] sm:$0xff]
      %v239 = vld [vmem:[%s225 + $0x10] sm:$0xff]
      %v240 = vld [vmem:[%s225 + $0x18] sm:$0xff]
      %v241 = vld [vmem:[%s225 + $0x20] sm:$0xff]
      %v242 = vld [vmem:[%s225 + $0x28] sm:$0xff]
      %v243 = vld [vmem:[%s225 + $0x30] sm:$0x7]
      %v244 = vld [vmem:[%s225 + $0x38] sm:$0x7]
      %v245 = vld [vmem:[%s1] sm:$0xff]
      %v246 = vld [vmem:[%s1 + $0x8] sm:$0x1f]
      %vm247 = vcmp.gt.f32.partialorder %v237, -inf
      %vm248 = vcmp.gt.f32.partialorder %v238, -inf
      %vm249 = vcmp.gt.f32.partialorder %v239, -inf
      %vm250 = vcmp.gt.f32.partialorder %v240, -inf
      %vm251 = vcmp.gt.f32.partialorder %v241, -inf
      %vm252 = vcmp.gt.f32.partialorder %v242, -inf
      %vm253 = vcmp.gt.f32.partialorder %v243, -inf
      %vm254 = vcmp.gt.f32.partialorder %v244, -inf
      %v255 = vsel %vm247, %v237, 0.0
      %v256 = vsel %vm248, %v238, 0.0
      %v257 = vsel %vm249, %v239, 0.0
      %v258 = vsel %vm250, %v240, 0.0
      %v259 = vsel %vm251, %v241, 0.0
      %v260 = vsel %vm252, %v242, 0.0
      %v261 = vsel %vm253, %v243, 0.0
      %v262 = vsel %vm254, %v244, 0.0
      %v265 = vrot.slane %v237, 3
      %v266 = vrot.slane %v238, 3
      %v269 = vmax.f32 %v237, %v265
      %v270 = vmax.f32 %v238, %v266
      %vm273 = vcmask 1041408
      %v274 = vrot.slane %v237, 6
      %v275 = vrot.slane %v239, 6
      %v276 = vsel %vm273, %v274, %v275
      %v277 = vrot.slane %v238, 6
      %v278 = vrot.slane %v240, 6
      %v279 = vsel %vm273, %v277, %v278
      %v282 = vmax.f32 %v269, %v276
      %v283 = vmax.f32 %v270, %v279
      %v284 = vrot.slane %v239, 1
      %v285 = vrot.slane %v240, 1
      %v288 = vmax.f32 %v282, %v284
      %v289 = vmax.f32 %v283, %v285
      %v290 = vrot.slane %v239, 4
      %v291 = vrot.slane %v240, 4
      %v294 = vmax.f32 %v288, %v290
      %v295 = vmax.f32 %v289, %v291
      %vm298 = vcmask 1040384
      %v299 = vrot.slane %v239, 7
      %v300 = vrot.slane %v241, 7
      %v301 = vsel %vm298, %v299, %v300
      %v302 = vrot.slane %v240, 7
      %v303 = vrot.slane %v242, 7
      %v304 = vsel %vm298, %v302, %v303
      %v307 = vmax.f32 %v294, %v301
      %v308 = vmax.f32 %v295, %v304
      %v309 = vrot.slane %v241, 2
      %v310 = vrot.slane %v242, 2
      %v313 = vmax.f32 %v307, %v309
      %v314 = vmax.f32 %v308, %v310
      %v315 = vrot.slane %v241, 5
      %v316 = vrot.slane %v242, 5
      %v319 = vmax.f32 %v313, %v315
      %v320 = vmax.f32 %v314, %v316
      %v321 = vmax.f32 %v319, %v243
      %v322 = vmax.f32 %v320, %v244
      %v323 = vld [vmem:[%s3] sm:$0xff]
      %v324 = vld [vmem:[%s3 + $0x8] sm:$0x1f]
      %326 = vset.pattern.permute.xlu0 0
      %327 = vperm.xlu0 %326, %v323
      %v328 = vpop.permute.xlu0 %327
      %331 = vset.pattern.permute.xlu0 0
      %332 = vperm.xlu0 %331, %v324
      %v333 = vpop.permute.xlu0 %332
      %vm335 = vcmask 220160
      %v337 = vsel %vm335, %v245, 0
      %v340 = vsel %vm335, %v246, 0
      %vm342 = vcmask 1042432
      %v344 = vsel %vm342, %v261, 0
      %v347 = vsel %vm342, %v262, 0
      %349 = vmatprep.subr.mxu0 0.0
      %350 = vmatpush1.msra.mxu0 0.0
      %351 = vmatprep.subr.mxu0 0.0
      %352 = vmatpush1.msra.mxu0 0.0
      %353 = vmatprep.subr.mxu0 0.0
      %354 = vmatpush1.msra.mxu0 0.0
      %355 = vmatprep.subr.mxu0 0.0
      %356 = vmatpush1.msra.mxu0 0.0
      %357 = vmatprep.subr.mxu0 0.0
      %358 = vmatpush1.msra.mxu0 0.0
      %359 = vmatprep.subr.mxu0 0.0
      %360 = vmatpush1.msra.mxu0 0.0
      %361 = vmatprep.subr.mxu0 0.0
      %362 = vmatpush1.msra.mxu0 0.0
      %363 = vmatprep.subr.mxu0 0.0
      %364 = vmatpush1.msra.mxu0 0.0
      %365 = vmatprep.subr.mxu0 0.0
      %366 = vmatpush1.msra.mxu0 0.0
      %367 = vmatprep.subr.mxu0 0.0
      %368 = vmatpush1.msra.mxu0 0.0
      %369 = vmatprep.subr.mxu0 0.0
      %370 = vmatpush1.msra.mxu0 0.0
      %371 = vmatprep.subr.mxu0 0.0
      %372 = vmatpush1.msra.mxu0 0.0
      %373 = vmatprep.subr.mxu0 %v347
      %374 = vmatpush1.msra.mxu0 %v344
      %375 = vmatprep.subr.mxu0 %v260
      %376 = vmatpush1.msra.mxu0 %v259
      %377 = vmatprep.subr.mxu0 %v258
      %378 = vmatpush1.msra.mxu0 %v257
      %379 = vmatprep.subr.mxu0 %v256
      %380 = vmatpush1.msra.mxu0 %v255
      %381 = vmatprep.subr.mxu0 0.0
      %382 = vmatpush2.msra.mxu0 0.0
      %383 = vmatprep.subr.mxu0 0.0
      %384 = vmatpush2.msra.mxu0 0.0
      %385 = vmatprep.subr.mxu0 0.0
      %386 = vmatpush2.msra.mxu0 0.0
      %387 = vmatprep.subr.mxu0 0.0
      %388 = vmatpush2.msra.mxu0 0.0
      %389 = vmatprep.subr.mxu0 0.0
      %390 = vmatpush2.msra.mxu0 0.0
      %391 = vmatprep.subr.mxu0 0.0
      %392 = vmatpush2.msra.mxu0 0.0
      %393 = vmatprep.subr.mxu0 0.0
      %394 = vmatpush2.msra.mxu0 0.0
      %395 = vmatprep.subr.mxu0 0.0
      %396 = vmatpush2.msra.mxu0 0.0
      %397 = vmatprep.subr.mxu0 0.0
      %398 = vmatpush2.msra.mxu0 0.0
      %399 = vmatprep.subr.mxu0 0.0
      %400 = vmatpush2.msra.mxu0 0.0
      %401 = vmatprep.subr.mxu0 0.0
      %402 = vmatpush2.msra.mxu0 0.0
      %403 = vmatprep.subr.mxu0 0.0
      %404 = vmatpush2.msra.mxu0 0.0
      %405 = vmatprep.subr.mxu0 0.0
      %406 = vmatpush2.msra.mxu0 0.0
      %407 = vmatprep.subr.mxu0 0.0
      %408 = vmatpush2.msra.mxu0 0.0
      %409 = vmatprep.subr.mxu0 0.0
      %410 = vmatpush2.msra.mxu0 0.0
      %411 = vmatprep.subr.mxu0 0.0
      %412 = vmatpush2.msra.mxu0 0.0
      %413 = vmatprep.mubr.f32.mxu0 0.0
      %414 = vmatmul.mubr.f32.gmra.mxu0 %v337
      %v415 = vpop.f32.mrf.mxu0
      %v416 = vadd.f32 %v328, %v415
      %v417 = vpop.f32.mrf.mxu0
      %v418 = vadd.f32 %v328, %v417
      %419 = vmatprep.mubr.f32.mxu0 0.0
      %420 = vmatmul.mubr.f32.gmra.mxu0 %v340
      %v421 = vpop.f32.mrf.mxu0
      %v422 = vadd.f32 %v333, %v421
      %v423 = vpop.f32.mrf.mxu0
      %v424 = vadd.f32 %v333, %v423
      %425 = vdwg.mxu0
      %v426 = vld [vmem:[%s2 + $0xd] sm:$0x7]
      %428 = vset.pattern.permute.xlu0 0
      %429 = vperm.xlu0 %428, %v426
      %v430 = vpop.permute.xlu0 %429
      %v432 = vmul.f32 %v321, %v430
      %v433 = vmul.f32 %v322, %v430
      %v434 = vld [vmem:[%s3 + $0xd] sm:$0x7]
      %436 = vset.pattern.permute.xlu0 0
      %437 = vperm.xlu0 %436, %v434
      %v438 = vpop.permute.xlu0 %437
      %v440 = vadd.f32 %v432, %v438
      %v441 = vadd.f32 %v433, %v438
      %v444 = vrot.slane %v440, 3
      %v445 = vrot.slane %v441, 3
      %vm448 = vcmask 1044480
      %v449 = vsel %vm448, %v422, %v444
      %v450 = vsel %vm448, %v424, %v445
      %v451 = vmax.f32 %v416, 0.0
      %v452 = vmax.f32 %v418, 0.0
      %v453 = vmax.f32 %v449, 0.0
      %v454 = vmax.f32 %v450, 0.0
      %455 = vst [vmem:[%s235] sm:$0xff] %v451
      %456 = vst [vmem:[%s235 + $0x8] sm:$0xff] %v452
      %457 = vst [vmem:[%s235 + $0x10] sm:$0xff] %v453
      %458 = vst [vmem:[%s235 + $0x18] sm:$0xff] %v454
      %s459 = smul.u32 2, %s20
      %p460 = scmp.lt.s32.totalorder %s19, 1
      %s461 = scalar_select %p460, %s19, 1
      %p462 = scmp.lt.s32.totalorder %s459, 1
      %s463 = scalar_select %p462, %s459, 1
      %s464 = smul.addr %s461, 4
      %s465 = sadd.s32 %s463, %s464
      %s466 = smul.addr %s465, 8
      %s467 = scalar_lea.vmem %s4, %s466
      // Predicated region
      $region37: #{initial_block.3} parent=35 // pred_check
        %p468 = pneg %p138
      $region38: #{initial_block.3} parent=35 // pred_check_branch
        %470 = sbr.rel (%p468) target = $region40
      $region39: #{initial_block.3} parent=35 // pred_region
        %s471 = smul.u32 2, %s20
      $region40: #{initial_block.3} parent=35 // pred_fallthru
        _
    $region36: #{initial_block.3} parent=5 // pred_fallthru
      _
    %p472 = scmp.le.s32.totalorder 2, %s10
    // Predicated region
    $region41: #{initial_block.3} parent=5 // pred_check
      %p473 = pneg %p472
    $region42: #{initial_block.3} parent=5 // pred_check_branch
      %475 = sbr.rel (%p473) target = $region44
    $region43: #{initial_block.3} parent=5 // pred_region
      %s476 = ssub.s32 %s10, 2
      // Predicated region
      $region45: #{initial_block.3} parent=43 // pred_check
        %p477 = pneg %p144
      $region46: #{initial_block.3} parent=43 // pred_check_branch
        %479 = sbr.rel (%p477) target = $region48
      $region47: #{initial_block.3} parent=43 // pred_region
        %s480 = smul.u32 2, %s22
        %p481 = scmp.lt.s32.totalorder %s21, 1
        %s482 = scalar_select %p481, %s21, 1
        %p483 = scmp.lt.s32.totalorder %s480, 1
        %s484 = scalar_select %p483, %s480, 1
        %s485 = smul.addr %s482, 4
        %s486 = sadd.s32 %s484, %s485
        %s487 = smul.addr %s486, 8
        %s488 = scalar_lea.vmem %s4, %s487
      $region48: #{initial_block.3} parent=43 // pred_fallthru
        _
    $region44: #{initial_block.3} parent=5 // pred_fallthru
      _
  $region6: #{initial_block.3} parent=0 // loop_footer
    %s14 = sadd.s32 1, %s10
  $region7: #{initial_block.3} parent=0 // loop_footer_branch
    %9 = sbr.rel target = $region3
  $region8: #{initial_block.3} parent=0 // loop_exit
    _

</llo_original>
